<compile_context>
chip_gen: v7x
topology: tpu7x:2x2x1
jax: 0.10.0
libtpu: 0.0.40
codegen_flags: <defaults>
</compile_context>

<pallas_src>
import jax
import jax.numpy as jnp
from jax import lax
from jax.experimental import pallas as pl
from jax.experimental.pallas import tpu as pltpu


def _pick_hw_chunk(hw, tb, c):
    """Largest of (32, 16, 8) dividing hw that keeps a chunk <= ~32 f32 vregs."""
    budget_elems = 32 * 1024  # 128 KiB of f32 per chunk
    chosen = None
    for cand in (32, 16, 8):
        if hw % cand == 0:
            chosen = cand
            if tb * cand * c <= budget_elems:
                break
    return chosen if chosen is not None else hw


def affinity_loss(x_nchw, labels, centers, *, tile_b=8):
    """Forward pass of AffinityLoss.

    x_nchw:  (B, C, H, W) activations (f32 or bf16)
    labels:  (B,) integer class labels in [0, K)
    centers: (K, C) class centers
    """
    B, C, H, W = x_nchw.shape
    K, C2 = centers.shape
    assert C2 == C, "centers feature dim must match channel dim"
    assert K >= 2, "unbiased variance over classes requires num_class >= 2"
    HW = H * W

    # ---- glue / layout --------------------------------------------------
    # Lane-dense layout for the dominant array: (B, HW, C) puts C on the
    # 128-lane axis.  bf16 activations stay bf16 (f32 accumulation in-kernel).
    x_dtype = jnp.bfloat16 if x_nchw.dtype == jnp.bfloat16 else jnp.float32
    x_t = jnp.transpose(x_nchw.reshape(B, C, HW), (0, 2, 1)).astype(x_dtype)
    labels2d = labels.astype(jnp.int32).reshape(B, 1)
    centers_f = centers.astype(jnp.float32)            # (K, C), un-transposed

    # ---- batch tiling ---------------------------------------------------
    TB = min(tile_b, B)
    if TB < B:
        # multi-tile: keep the (TB, 1) labels block sublane-aligned
        TB = max(8, (TB // 8) * 8)
    B_pad = pl.cdiv(B, TB) * TB
    if B_pad != B:
        x_t = jnp.pad(x_t, ((0, B_pad - B), (0, 0), (0, 0)))
        labels2d = jnp.pad(labels2d, ((0, B_pad - B), (0, 0)))
    num_tiles = B_pad // TB

    hw_chunk = _pick_hw_chunk(HW, TB, C)
    n_chunks = HW // hw_chunk
    inv_hw = 1.0 / float(HW)

    def kernel(x_ref, labels_ref, centers_ref, out_ref):
        # x_ref:       (TB, HW, C)  VMEM (f32 or bf16)
        # labels_ref:  (TB, 1)      VMEM int32
        # centers_ref: (K, C)       VMEM f32
        # out_ref:     (1, 1)       SMEM f32 — per-tile partial loss sum

        # --- global average pool, chunked over HW (bounded vreg pressure) ---
        def gap_body(h, acc):
            start = pl.multiple_of(h * hw_chunk, hw_chunk)
            chunk = x_ref[:, pl.ds(start, hw_chunk), :].astype(jnp.float32)
            return acc + jnp.sum(chunk, axis=1)

        feat = lax.fori_loop(0, n_chunks, gap_body,
                             jnp.zeros((TB, C), jnp.float32),
                             unroll=(n_chunks <= 8))
        feat = feat * inv_hw                                    # (TB, C)

        ct = centers_ref[...]                                   # (K, C)

        # --- gather the one center per sample via a tiny one-hot matmul ---
        lbl = labels_ref[...]                                   # (TB, 1)
        cls = lax.broadcasted_iota(jnp.int32, (TB, K), 1)
        onehot = (lbl == cls).astype(jnp.float32)               # (TB, K)
        c_sel = jnp.dot(onehot, ct,
                        preferred_element_type=jnp.float32)     # (TB, C)

        diff = feat - c_sel
        d = jnp.sum(diff * diff, axis=1, keepdims=True)         # (TB, 1)

        # --- centers.var(dim=0).sum() (unbiased), reciprocal hoisted ---
        c_mean = jnp.mean(ct, axis=0, keepdims=True)            # (1, C)
        var_sum = jnp.sum((ct - c_mean) ** 2) * (1.0 / (K - 1))
        inv_var = 1.0 / var_sum

        d = jnp.clip(d * inv_var, 1e-12, 1e12)                  # (TB, 1)

        if B_pad != B:  # trace-time branch: mask padded batch rows
            row = (lax.broadcasted_iota(jnp.int32, (TB, 1), 0)
                   + pl.program_id(0) * TB)
            d = jnp.where(row < B, d, 0.0)

        out_ref[0, 0] = jnp.sum(d)

    partials = pl.pallas_call(
        kernel,
        out_shape=jax.ShapeDtypeStruct((num_tiles, 1), jnp.float32),
        grid=(num_tiles,),
        in_specs=[
            pl.BlockSpec((TB, HW, C), lambda i: (i, 0, 0)),
            pl.BlockSpec((TB, 1), lambda i: (i, 0)),
            pl.BlockSpec((K, C), lambda i: (0, 0)),
        ],
        out_specs=pl.BlockSpec((1, 1), lambda i: (i, 0),
                               memory_space=pltpu.MemorySpace.SMEM),
        compiler_params=pltpu.CompilerParams(
            dimension_semantics=("parallel",),      # v7x: both TCs split B tiles
            vmem_limit_bytes=32 * 1024 * 1024,      # safe on v5e/v6e/v7x
        ),
    )(x_t, labels2d, centers_f)

    # Each masked-out (b, k != label) entry clamps to 1e-12 in the reference;
    # add them back in closed form so the gather path matches the module.
    loss = (jnp.sum(partials) + float(B * (K - 1)) * 1e-12) / B
    return loss


if __name__ == "__main__":
    # module defaults: num_class=8, feat_dim=512; small batch / spatial
    B, C, H, W, K = 2, 512, 8, 8, 8

    key = jax.random.PRNGKey(0)
    k1, k2, k3 = jax.random.split(key, 3)
    x = jax.random.normal(k1, (B, C, H, W), dtype=jnp.float32)
    labels = jax.random.randint(k2, (B,), 0, K, dtype=jnp.int32)
    # deterministic "parameter", mirrors torch.randn(num_class, feat_dim)
    centers = jax.random.normal(k3, (K, C), dtype=jnp.float32)

    loss = affinity_loss(x, labels, centers)
    loss = jax.block_until_ready(loss)

    # pure-JAX reference mirroring the torch forward (incl. clamp-after-mask)
    feat = x.reshape(B, C, H * W).mean(-1)
    distmat = (
        jnp.sum(feat ** 2, axis=1, keepdims=True)
        + jnp.sum(centers ** 2, axis=1)[None, :]
        - 2.0 * feat @ centers.T
    )
    mask = (labels[:, None] == jnp.arange(K)[None, :]).astype(jnp.float32)
    var_sum = jnp.sum(jnp.var(centers, axis=0, ddof=1))
    ref = jnp.sum(jnp.clip(distmat * mask / var_sum, 1e-12, 1e12)) / B

    assert jnp.allclose(loss, ref, rtol=1e-4, atol=1e-5), (loss, ref)
    print("KERNEL_OK")
</pallas_src>

<mosaic_0001>
module attributes {stable_mosaic.version = 11 : i64} {
  func.func @kernel(%arg0: i32, %arg1: memref<2x64x512xf32, #tpu.memory_space<vmem>>, %arg2: memref<2x1xi32, #tpu.memory_space<vmem>>, %arg3: memref<8x512xf32, #tpu.memory_space<vmem>>, %arg4: memref<1x1xf32, #tpu.memory_space<smem>>) attributes {dimension_semantics = [#tpu.dimension_semantics<parallel>], iteration_bounds = array<i64: 1>, scalar_prefetch = 0 : i64, scratch_operands = 0 : i64, tpu.core_type = #tpu.core_type<tc>, window_params = [{transform_indices = @transform_0, window_bounds = array<i64: 2, 64, 512>}, {transform_indices = @transform_1, window_bounds = array<i64: 2, 1>}, {pipeline_mode = #tpu.pipeline_mode<synchronous>, transform_indices = @transform_2, window_bounds = array<i64: 8, 512>}, {transform_indices = @transform_3, window_bounds = array<i64: 1, 1>}]} {
    %cst = arith.constant 0.000000e+00 : f32
    %0 = vector.broadcast %cst : f32 to vector<2x512xf32>
    %c0_i32 = arith.constant 0 : i32
    %c32_i32 = arith.constant 32 : i32
    %1 = arith.muli %c0_i32, %c32_i32 : i32
    %2 = tpu.assume_multiple %1, 32 : i32
    %c0 = arith.constant 0 : index
    %3 = arith.index_cast %2 : i32 to index
    %c0_0 = arith.constant 0 : index
    %4 = vector.load %arg1[%c0, %3, %c0_0] : memref<2x64x512xf32, #tpu.memory_space<vmem>>, vector<2x32x512xf32>
    %cst_1 = arith.constant dense<0.000000e+00> : vector<2x512xf32>
    %5 = vector.multi_reduction <add>, %4, %cst_1 [1] : vector<2x32x512xf32> to vector<2x512xf32>
    %6 = arith.addf %0, %5 : vector<2x512xf32>
    %c1_i32 = arith.constant 1 : i32
    %c32_i32_2 = arith.constant 32 : i32
    %7 = arith.muli %c1_i32, %c32_i32_2 : i32
    %8 = tpu.assume_multiple %7, 32 : i32
    %c0_3 = arith.constant 0 : index
    %9 = arith.index_cast %8 : i32 to index
    %c0_4 = arith.constant 0 : index
    %10 = vector.load %arg1[%c0_3, %9, %c0_4] : memref<2x64x512xf32, #tpu.memory_space<vmem>>, vector<2x32x512xf32>
    %cst_5 = arith.constant dense<0.000000e+00> : vector<2x512xf32>
    %11 = vector.multi_reduction <add>, %10, %cst_5 [1] : vector<2x32x512xf32> to vector<2x512xf32>
    %12 = arith.addf %6, %11 : vector<2x512xf32>
    %c2_i32 = arith.constant 2 : i32
    %cst_6 = arith.constant 1.562500e-02 : f32
    %13 = vector.broadcast %cst_6 : f32 to vector<2x512xf32>
    %14 = arith.mulf %12, %13 : vector<2x512xf32>
    %c0_7 = arith.constant 0 : index
    %c0_8 = arith.constant 0 : index
    %15 = vector.load %arg3[%c0_7, %c0_8] : memref<8x512xf32, #tpu.memory_space<vmem>>, vector<8x512xf32>
    %c0_9 = arith.constant 0 : index
    %c0_10 = arith.constant 0 : index
    %16 = vector.load %arg2[%c0_9, %c0_10] : memref<2x1xi32, #tpu.memory_space<vmem>>, vector<2x1xi32>
    %17 = tpu.iota {dimensions = array<i32: 1>} : vector<2x8xi32>
    %18 = vector.broadcast %16 : vector<2x1xi32> to vector<2x8xi32>
    %19 = arith.cmpi eq, %18, %17 : vector<2x8xi32>
    %20 = arith.extui %19 : vector<2x8xi1> to vector<2x8xi32>
    %21 = arith.sitofp %20 : vector<2x8xi32> to vector<2x8xf32>
    %cst_11 = arith.constant dense<0.000000e+00> : vector<2x512xf32>
    %22 = tpu.matmul %21, %15, %cst_11 {dimension_numbers = #tpu.dot_dimension_numbers<[1], [0], [0], [1], [0, 0, 1, 1], [], []>} : vector<2x8xf32>, vector<8x512xf32>, vector<2x512xf32> -> vector<2x512xf32>
    %23 = arith.subf %14, %22 : vector<2x512xf32>
    %24 = arith.mulf %23, %23 : vector<2x512xf32>
    %cst_12 = arith.constant dense<0.000000e+00> : vector<2xf32>
    %25 = vector.multi_reduction <add>, %24, %cst_12 [1] : vector<2x512xf32> to vector<2xf32>
    %26 = vector.shape_cast %25 : vector<2xf32> to vector<2x1xf32>
    %cst_13 = arith.constant dense<0.000000e+00> : vector<512xf32>
    %27 = vector.multi_reduction <add>, %15, %cst_13 [0] : vector<8x512xf32> to vector<512xf32>
    %28 = vector.shape_cast %27 : vector<512xf32> to vector<1x512xf32>
    %cst_14 = arith.constant 8.000000e+00 : f32
    %29 = vector.broadcast %cst_14 : f32 to vector<1x512xf32>
    %30 = arith.divf %28, %29 : vector<1x512xf32>
    %31 = vector.broadcast %30 : vector<1x512xf32> to vector<8x512xf32>
    %32 = arith.subf %15, %31 : vector<8x512xf32>
    %33 = arith.mulf %32, %32 : vector<8x512xf32>
    %34 = vector.shape_cast %33 : vector<8x512xf32> to vector<1x8x512xf32>
    %cst_15 = arith.constant dense<0.000000e+00> : vector<1xf32>
    %35 = vector.multi_reduction <add>, %34, %cst_15 [1, 2] : vector<1x8x512xf32> to vector<1xf32>
    %36 = vector.shape_cast %35 : vector<1xf32> to vector<1x1x1xf32>
    %37 = vector.extract %36[0, 0, 0] : f32 from vector<1x1x1xf32>
    %cst_16 = arith.constant 0.142857149 : f32
    %38 = arith.mulf %37, %cst_16 : f32
    %cst_17 = arith.constant 1.000000e+00 : f32
    %39 = arith.divf %cst_17, %38 : f32
    %40 = vector.broadcast %39 : f32 to vector<2x1xf32>
    %41 = arith.mulf %26, %40 : vector<2x1xf32>
    %cst_18 = arith.constant 9.99999996E-13 : f32
    %cst_19 = arith.constant 9.99999995E+11 : f32
    %42 = vector.broadcast %cst_18 : f32 to vector<2x1xf32>
    %43 = arith.maximumf %42, %41 : vector<2x1xf32>
    %44 = vector.broadcast %cst_19 : f32 to vector<2x1xf32>
    %45 = arith.minimumf %44, %43 : vector<2x1xf32>
    %46 = vector.shape_cast %45 : vector<2x1xf32> to vector<1x2x1xf32>
    %cst_20 = arith.constant dense<0.000000e+00> : vector<1xf32>
    %47 = vector.multi_reduction <add>, %46, %cst_20 [1, 2] : vector<1x2x1xf32> to vector<1xf32>
    %48 = vector.shape_cast %47 : vector<1xf32> to vector<1x1x1xf32>
    %49 = vector.extract %48[0, 0, 0] : f32 from vector<1x1x1xf32>
    %c0_21 = arith.constant 0 : index
    %c0_22 = arith.constant 0 : index
    %50 = memref.load %arg4[%c0_21, %c0_22] : memref<1x1xf32, #tpu.memory_space<smem>>
    memref.store %49, %arg4[%c0_21, %c0_22] : memref<1x1xf32, #tpu.memory_space<smem>>
    return
  }
  func.func @transform_0(%arg0: i32) -> (i32, i32, i32) {
    %c0_i32 = arith.constant 0 : i32
    %c0_i32_0 = arith.constant 0 : i32
    %c0_i32_1 = arith.constant 0 : i32
    return %arg0, %c0_i32, %c0_i32_0 : i32, i32, i32
  }
  func.func @transform_1(%arg0: i32) -> (i32, i32) {
    %c0_i32 = arith.constant 0 : i32
    %c0_i32_0 = arith.constant 0 : i32
    return %arg0, %c0_i32 : i32, i32
  }
  func.func @transform_2(%arg0: i32) -> (i32, i32) {
    %c0_i32 = arith.constant 0 : i32
    %c0_i32_0 = arith.constant 0 : i32
    %c0_i32_1 = arith.constant 0 : i32
    return %c0_i32, %c0_i32_0 : i32, i32
  }
  func.func @transform_3(%arg0: i32) -> (i32, i32) {
    %c0_i32 = arith.constant 0 : i32
    %c0_i32_0 = arith.constant 0 : i32
    return %arg0, %c0_i32 : i32, i32
  }
}

</mosaic_0001>

<llo_original>
// kernel: tpu_custom_call.1
$region0: #{tpu_custom_call.1}
  #allocation0 [shape = 'u32[]', space=smem, size = 0x4, offset = 0x4, fixed_abs, tag = 'smem constant byte address 0x4 - core index']
  #allocation1 [shape = 'u32[144,128]{1,0:T(1,128)}', space=vmem, size = 0x12000, scoped, tag = 'internal scratch']
  %s0 = inlined_call_operand.hbm [shape: f32[2,64,512], index: 0, kind: input, shape index: {}]
  %s1 = inlined_call_operand.vmem [shape: s32[2,1], index: 1, kind: input, shape index: {}]
  %s2 = inlined_call_operand.hbm [shape: f32[8,512], index: 2, kind: input, shape index: {}]
  %s3 = inlined_call_operand.hbm [shape: f32[1,1], index: 3, kind: output, shape index: {}]
  %s4 = sld [smem:[#allocation0]]
  $region30: #{tpu_custom_call.1} parent=0
    _
  %s6 = ssub.s32 1, %s4
  %s7 = scalar_select 0, %s6, %s4
  $region1: #{tpu_custom_call.1} parent=0
    #allocation2 [shape = 'u8[262144]{0}', space=vmem, size = 0x40000, scoped, tag = 'input window, operand 0, single buffered']
    #allocation3 [shape = 's32[1]{0}', space=sflag, size = 0x4, scoped, tag = 'scoped memory for tpu_custom_call.1']
    #allocation4 [shape = 's32[1]{0}', space=sflag, size = 0x4, scoped, tag = 'scoped memory for tpu_custom_call.1']
    #allocation5 [shape = 'u8[16384]{0}', space=vmem, size = 0x4000, scoped, tag = 'input window, operand 2, single buffered']
    #allocation6 [shape = 's32[1]{0}', space=sflag, size = 0x4, scoped, tag = 'scoped memory for tpu_custom_call.1']
    #allocation7 [shape = 'u8[512]{0}', space=smem, size = 0x200, scoped, tag = 'output window, operand 0, single buffered']
    %8 = vsyncpa [#allocation3], 0
    %9 = vsyncpa [#allocation6], 0
    %10 = vsyncpa [#allocation4], 0
    // Predicated region
    $region2: #{tpu_custom_call.1} parent=1 // pred_check
      _
    $region3: #{tpu_custom_call.1} parent=1 // pred_check_branch
      %12 = sbr.rel (0) target = $region5
    $region4: #{tpu_custom_call.1} parent=1 // pred_region
      %s14 = ssub.s32 8192, 8192
      %15 = vsyncadd [#allocation3], %s14
      %s16 = sshll.u32 [#allocation2], 4
      %s17 = int_to_ptr.vmem [resolvable:$true] %s16
      %22 = dma.hbm_to_vmem [thread:$0]  %s0, 8192, %s17, [#allocation3], 512, 512, 32
    $region5: #{tpu_custom_call.1} parent=1 // pred_fallthru
      _
    // Predicated region
    $region6: #{tpu_custom_call.1} parent=1 // pred_check
      _
    $region7: #{tpu_custom_call.1} parent=1 // pred_check_branch
      %24 = sbr.rel (0) target = $region9
    $region8: #{tpu_custom_call.1} parent=1 // pred_region
      _
    $region9: #{tpu_custom_call.1} parent=1 // pred_fallthru
      _
    // Predicated region
    $region10: #{tpu_custom_call.1} parent=1 // pred_check
      _
    $region11: #{tpu_custom_call.1} parent=1 // pred_check_branch
      %26 = sbr.rel (0) target = $region13
    $region12: #{tpu_custom_call.1} parent=1 // pred_region
      %s28 = ssub.s32 512, 512
      %29 = vsyncadd [#allocation6], %s28
      %s31 = sshll.u32 [#allocation5], 4
      %s32 = int_to_ptr.vmem [resolvable:$true] %s31
      %34 = dma.hbm_to_vmem [thread:$0]  %s2, 512, %s32, [#allocation6]
    $region13: #{tpu_custom_call.1} parent=1 // pred_fallthru
      _
    // Predicated region
    $region14: #{tpu_custom_call.1} parent=1 // pred_check
      _
    $region15: #{tpu_custom_call.1} parent=1 // pred_check_branch
      %36 = sbr.rel (0) target = $region17
    $region16: #{tpu_custom_call.1} parent=1 // pred_region
      %37 = dma.done [#allocation3], 8192
    $region17: #{tpu_custom_call.1} parent=1 // pred_fallthru
      _
    // Predicated region
    $region18: #{tpu_custom_call.1} parent=1 // pred_check
      _
    $region19: #{tpu_custom_call.1} parent=1 // pred_check_branch
      %39 = sbr.rel (0) target = $region21
    $region20: #{tpu_custom_call.1} parent=1 // pred_region
      %40 = dma.done [#allocation6], 512
    $region21: #{tpu_custom_call.1} parent=1 // pred_fallthru
      _
    %s41 = smul.u32 0, 4
    %s42 = smul.addr %s41, 8
    %s43 = scalar_lea.vmem [#allocation2], %s42
    %v44 = vld [vmem:[%s43] sm:$0xff]
    %v45 = vld [vmem:[%s43 + $0x8] sm:$0xff]
    %v46 = vld [vmem:[%s43 + $0x10] sm:$0xff]
    %v47 = vld [vmem:[%s43 + $0x18] sm:$0xff]
    %v48 = vld [vmem:[%s43 + $0x20] sm:$0xff]
    %v49 = vld [vmem:[%s43 + $0x28] sm:$0xff]
    %v50 = vld [vmem:[%s43 + $0x30] sm:$0xff]
    %v51 = vld [vmem:[%s43 + $0x38] sm:$0xff]
    %v52 = vld [vmem:[%s43 + $0x40] sm:$0xff]
    %v53 = vld [vmem:[%s43 + $0x48] sm:$0xff]
    %v54 = vld [vmem:[%s43 + $0x50] sm:$0xff]
    %v55 = vld [vmem:[%s43 + $0x58] sm:$0xff]
    %v56 = vld [vmem:[%s43 + $0x60] sm:$0xff]
    %v57 = vld [vmem:[%s43 + $0x68] sm:$0xff]
    %v58 = vld [vmem:[%s43 + $0x70] sm:$0xff]
    %v59 = vld [vmem:[%s43 + $0x78] sm:$0xff]
    %v60 = vld [vmem:[%s43 + $0x100] sm:$0xff]
    %v61 = vld [vmem:[%s43 + $0x108] sm:$0xff]
    %v62 = vld [vmem:[%s43 + $0x110] sm:$0xff]
    %v63 = vld [vmem:[%s43 + $0x118] sm:$0xff]
    %v64 = vld [vmem:[%s43 + $0x120] sm:$0xff]
    %v65 = vld [vmem:[%s43 + $0x128] sm:$0xff]
    %v66 = vld [vmem:[%s43 + $0x130] sm:$0xff]
    %v67 = vld [vmem:[%s43 + $0x138] sm:$0xff]
    %v68 = vld [vmem:[%s43 + $0x140] sm:$0xff]
    %v69 = vld [vmem:[%s43 + $0x148] sm:$0xff]
    %v70 = vld [vmem:[%s43 + $0x150] sm:$0xff]
    %v71 = vld [vmem:[%s43 + $0x158] sm:$0xff]
    %v72 = vld [vmem:[%s43 + $0x160] sm:$0xff]
    %v73 = vld [vmem:[%s43 + $0x168] sm:$0xff]
    %v74 = vld [vmem:[%s43 + $0x170] sm:$0xff]
    %v75 = vld [vmem:[%s43 + $0x178] sm:$0xff]
    %v76 = vadd.f32 %v44, %v48
    %v77 = vadd.f32 %v76, %v52
    %v78 = vadd.f32 %v77, %v56
    %v79 = vrot.slane %v78, 4
    %v80 = vadd.f32 %v78, %v79
    %v81 = vrot.slane %v80, 2
    %v82 = vadd.f32 %v80, %v81
    %v83 = vrot.slane %v82, 1
    %v84 = vadd.f32 %v82, %v83
    %v85 = vadd.f32 %v45, %v49
    %v86 = vadd.f32 %v85, %v53
    %v87 = vadd.f32 %v86, %v57
    %v88 = vrot.slane %v87, 4
    %v89 = vadd.f32 %v87, %v88
    %v90 = vrot.slane %v89, 2
    %v91 = vadd.f32 %v89, %v90
    %v92 = vrot.slane %v91, 1
    %v93 = vadd.f32 %v91, %v92
    %v94 = vadd.f32 %v46, %v50
    %v95 = vadd.f32 %v94, %v54
    %v96 = vadd.f32 %v95, %v58
    %v97 = vrot.slane %v96, 4
    %v98 = vadd.f32 %v96, %v97
    %v99 = vrot.slane %v98, 2
    %v100 = vadd.f32 %v98, %v99
    %v101 = vrot.slane %v100, 1
    %v102 = vadd.f32 %v100, %v101
    %v103 = vadd.f32 %v47, %v51
    %v104 = vadd.f32 %v103, %v55
    %v105 = vadd.f32 %v104, %v59
    %v106 = vrot.slane %v105, 4
    %v107 = vadd.f32 %v105, %v106
    %v108 = vrot.slane %v107, 2
    %v109 = vadd.f32 %v107, %v108
    %v110 = vrot.slane %v109, 1
    %v111 = vadd.f32 %v109, %v110
    %v112 = vadd.f32 %v60, %v64
    %v113 = vadd.f32 %v112, %v68
    %v114 = vadd.f32 %v113, %v72
    %v115 = vrot.slane %v114, 4
    %v116 = vadd.f32 %v114, %v115
    %v117 = vrot.slane %v116, 2
    %v118 = vadd.f32 %v116, %v117
    %v119 = vrot.slane %v118, 1
    %v120 = vadd.f32 %v118, %v119
    %v121 = vadd.f32 %v61, %v65
    %v122 = vadd.f32 %v121, %v69
    %v123 = vadd.f32 %v122, %v73
    %v124 = vrot.slane %v123, 4
    %v125 = vadd.f32 %v123, %v124
    %v126 = vrot.slane %v125, 2
    %v127 = vadd.f32 %v125, %v126
    %v128 = vrot.slane %v127, 1
    %v129 = vadd.f32 %v127, %v128
    %v130 = vadd.f32 %v62, %v66
    %v131 = vadd.f32 %v130, %v70
    %v132 = vadd.f32 %v131, %v74
    %v133 = vrot.slane %v132, 4
    %v134 = vadd.f32 %v132, %v133
    %v135 = vrot.slane %v134, 2
    %v136 = vadd.f32 %v134, %v135
    %v137 = vrot.slane %v136, 1
    %v138 = vadd.f32 %v136, %v137
    %v139 = vadd.f32 %v63, %v67
    %v140 = vadd.f32 %v139, %v71
    %v141 = vadd.f32 %v140, %v75
    %v142 = vrot.slane %v141, 4
    %v143 = vadd.f32 %v141, %v142
    %v144 = vrot.slane %v143, 2
    %v145 = vadd.f32 %v143, %v144
    %v146 = vrot.slane %v145, 1
    %v147 = vadd.f32 %v145, %v146
    %v148 = vadd.f32 %v84, 0.0
    %v149 = vadd.f32 %v93, 0.0
    %v150 = vadd.f32 %v102, 0.0
    %v151 = vadd.f32 %v111, 0.0
    %v152 = vadd.f32 %v120, 0.0
    %v153 = vadd.f32 %v129, 0.0
    %v154 = vadd.f32 %v138, 0.0
    %v155 = vadd.f32 %v147, 0.0
    %s156 = smul.u32 4, 4
    %s157 = smul.addr %s156, 8
    %s158 = scalar_lea.vmem [#allocation2], %s157
    %v159 = vld [vmem:[%s158] sm:$0xff]
    %v160 = vld [vmem:[%s158 + $0x8] sm:$0xff]
    %v161 = vld [vmem:[%s158 + $0x10] sm:$0xff]
    %v162 = vld [vmem:[%s158 + $0x18] sm:$0xff]
    %v163 = vld [vmem:[%s158 + $0x20] sm:$0xff]
    %v164 = vld [vmem:[%s158 + $0x28] sm:$0xff]
    %v165 = vld [vmem:[%s158 + $0x30] sm:$0xff]
    %v166 = vld [vmem:[%s158 + $0x38] sm:$0xff]
    %v167 = vld [vmem:[%s158 + $0x40] sm:$0xff]
    %v168 = vld [vmem:[%s158 + $0x48] sm:$0xff]
    %v169 = vld [vmem:[%s158 + $0x50] sm:$0xff]
    %v170 = vld [vmem:[%s158 + $0x58] sm:$0xff]
    %v171 = vld [vmem:[%s158 + $0x60] sm:$0xff]
    %v172 = vld [vmem:[%s158 + $0x68] sm:$0xff]
    %v173 = vld [vmem:[%s158 + $0x70] sm:$0xff]
    %v174 = vld [vmem:[%s158 + $0x78] sm:$0xff]
    %v175 = vld [vmem:[%s158 + $0x100] sm:$0xff]
    %v176 = vld [vmem:[%s158 + $0x108] sm:$0xff]
    %v177 = vld [vmem:[%s158 + $0x110] sm:$0xff]
    %v178 = vld [vmem:[%s158 + $0x118] sm:$0xff]
    %v179 = vld [vmem:[%s158 + $0x120] sm:$0xff]
    %v180 = vld [vmem:[%s158 + $0x128] sm:$0xff]
    %v181 = vld [vmem:[%s158 + $0x130] sm:$0xff]
    %v182 = vld [vmem:[%s158 + $0x138] sm:$0xff]
    %v183 = vld [vmem:[%s158 + $0x140] sm:$0xff]
    %v184 = vld [vmem:[%s158 + $0x148] sm:$0xff]
    %v185 = vld [vmem:[%s158 + $0x150] sm:$0xff]
    %v186 = vld [vmem:[%s158 + $0x158] sm:$0xff]
    %v187 = vld [vmem:[%s158 + $0x160] sm:$0xff]
    %v188 = vld [vmem:[%s158 + $0x168] sm:$0xff]
    %v189 = vld [vmem:[%s158 + $0x170] sm:$0xff]
    %v190 = vld [vmem:[%s158 + $0x178] sm:$0xff]
    %v191 = vadd.f32 %v159, %v163
    %v192 = vadd.f32 %v191, %v167
    %v193 = vadd.f32 %v192, %v171
    %v194 = vrot.slane %v193, 4
    %v195 = vadd.f32 %v193, %v194
    %v196 = vrot.slane %v195, 2
    %v197 = vadd.f32 %v195, %v196
    %v198 = vrot.slane %v197, 1
    %v199 = vadd.f32 %v197, %v198
    %v200 = vadd.f32 %v160, %v164
    %v201 = vadd.f32 %v200, %v168
    %v202 = vadd.f32 %v201, %v172
    %v203 = vrot.slane %v202, 4
    %v204 = vadd.f32 %v202, %v203
    %v205 = vrot.slane %v204, 2
    %v206 = vadd.f32 %v204, %v205
    %v207 = vrot.slane %v206, 1
    %v208 = vadd.f32 %v206, %v207
    %v209 = vadd.f32 %v161, %v165
    %v210 = vadd.f32 %v209, %v169
    %v211 = vadd.f32 %v210, %v173
    %v212 = vrot.slane %v211, 4
    %v213 = vadd.f32 %v211, %v212
    %v214 = vrot.slane %v213, 2
    %v215 = vadd.f32 %v213, %v214
    %v216 = vrot.slane %v215, 1
    %v217 = vadd.f32 %v215, %v216
    %v218 = vadd.f32 %v162, %v166
    %v219 = vadd.f32 %v218, %v170
    %v220 = vadd.f32 %v219, %v174
    %v221 = vrot.slane %v220, 4
    %v222 = vadd.f32 %v220, %v221
    %v223 = vrot.slane %v222, 2
    %v224 = vadd.f32 %v222, %v223
    %v225 = vrot.slane %v224, 1
    %v226 = vadd.f32 %v224, %v225
    %v227 = vadd.f32 %v175, %v179
    %v228 = vadd.f32 %v227, %v183
    %v229 = vadd.f32 %v228, %v187
    %v230 = vrot.slane %v229, 4
    %v231 = vadd.f32 %v229, %v230
    %v232 = vrot.slane %v231, 2
    %v233 = vadd.f32 %v231, %v232
    %v234 = vrot.slane %v233, 1
    %v235 = vadd.f32 %v233, %v234
    %v236 = vadd.f32 %v176, %v180
    %v237 = vadd.f32 %v236, %v184
    %v238 = vadd.f32 %v237, %v188
    %v239 = vrot.slane %v238, 4
    %v240 = vadd.f32 %v238, %v239
    %v241 = vrot.slane %v240, 2
    %v242 = vadd.f32 %v240, %v241
    %v243 = vrot.slane %v242, 1
    %v244 = vadd.f32 %v242, %v243
    %v245 = vadd.f32 %v177, %v181
    %v246 = vadd.f32 %v245, %v185
    %v247 = vadd.f32 %v246, %v189
    %v248 = vrot.slane %v247, 4
    %v249 = vadd.f32 %v247, %v248
    %v250 = vrot.slane %v249, 2
    %v251 = vadd.f32 %v249, %v250
    %v252 = vrot.slane %v251, 1
    %v253 = vadd.f32 %v251, %v252
    %v254 = vadd.f32 %v178, %v182
    %v255 = vadd.f32 %v254, %v186
    %v256 = vadd.f32 %v255, %v190
    %v257 = vrot.slane %v256, 4
    %v258 = vadd.f32 %v256, %v257
    %v259 = vrot.slane %v258, 2
    %v260 = vadd.f32 %v258, %v259
    %v261 = vrot.slane %v260, 1
    %v262 = vadd.f32 %v260, %v261
    %v263 = vadd.f32 %v148, %v199
    %v264 = vadd.f32 %v149, %v208
    %v265 = vadd.f32 %v150, %v217
    %v266 = vadd.f32 %v151, %v226
    %v267 = vadd.f32 %v152, %v235
    %v268 = vadd.f32 %v153, %v244
    %v269 = vadd.f32 %v154, %v253
    %v270 = vadd.f32 %v155, %v262
    %v271 = vmul.f32 %v263, 0.015625
    %v272 = vmul.f32 %v264, 0.015625
    %v273 = vmul.f32 %v265, 0.015625
    %v274 = vmul.f32 %v266, 0.015625
    %v275 = vmul.f32 %v267, 0.015625
    %v276 = vmul.f32 %v268, 0.015625
    %v277 = vmul.f32 %v269, 0.015625
    %v278 = vmul.f32 %v270, 0.015625
    %v279 = vld [vmem:[#allocation5] sm:$0xff]
    %v280 = vld [vmem:[#allocation5 + $0x8] sm:$0xff]
    %v281 = vld [vmem:[#allocation5 + $0x10] sm:$0xff]
    %v282 = vld [vmem:[#allocation5 + $0x18] sm:$0xff]
    %v283 = vld [vmem:[%s1] sm:$0x3]
    %v284 = vlaneseq
    %v285 = vand.u32 %v284, 127
    %286 = vset.pattern.permute.xlu0 0
    %287 = vperm.xlu0 %286, %v283
    %v288 = vpop.permute.xlu0 %287
    %vm289 = vcmp.eq.s32.totalorder %v288, %v285
    %v290 = vsel %vm289, 1, 0
    %v291 = vcvt.s32.f32 %v290
    %vm292 = vcmask 64512
    %v294 = vsel %vm292, %v291, 0
    %296 = vmatprep.subr.mxu0 %v280
    %297 = vmatpush1.msra.mxu0 %v279
    %298 = vmatprep.subr.mxu0 0.0
    %299 = vmatpush1.msra.mxu0 0.0
    %300 = vmatprep.subr.mxu0 0.0
    %301 = vmatpush1.msra.mxu0 0.0
    %302 = vmatprep.subr.mxu0 0.0
    %303 = vmatpush1.msra.mxu0 0.0
    %304 = vmatprep.subr.mxu0 0.0
    %305 = vmatpush1.msra.mxu0 0.0
    %306 = vmatprep.subr.mxu0 0.0
    %307 = vmatpush1.msra.mxu0 0.0
    %308 = vmatprep.subr.mxu0 0.0
    %309 = vmatpush1.msra.mxu0 0.0
    %310 = vmatprep.subr.mxu0 0.0
    %311 = vmatpush1.msra.mxu0 0.0
    %312 = vmatprep.subr.mxu0 0.0
    %313 = vmatpush1.msra.mxu0 0.0
    %314 = vmatprep.subr.mxu0 0.0
    %315 = vmatpush1.msra.mxu0 0.0
    %316 = vmatprep.subr.mxu0 0.0
    %317 = vmatpush1.msra.mxu0 0.0
    %318 = vmatprep.subr.mxu0 0.0
    %319 = vmatpush1.msra.mxu0 0.0
    %320 = vmatprep.subr.mxu0 0.0
    %321 = vmatpush1.msra.mxu0 0.0
    %322 = vmatprep.subr.mxu0 0.0
    %323 = vmatpush1.msra.mxu0 0.0
    %324 = vmatprep.subr.mxu0 0.0
    %325 = vmatpush1.msra.mxu0 0.0
    %326 = vmatprep.subr.mxu0 0.0
    %327 = vmatpush1.msra.mxu0 0.0
    %328 = vmatprep.subr.mxu0 0.0
    %329 = vmatpush1.msra.mxu0 0.0
    %330 = vmatprep.subr.mxu0 0.0
    %331 = vmatpush1.msra.mxu0 0.0
    %332 = vmatprep.subr.mxu0 0.0
    %333 = vmatpush1.msra.mxu0 0.0
    %334 = vmatprep.subr.mxu0 0.0
    %335 = vmatpush1.msra.mxu0 0.0
    %336 = vmatprep.subr.mxu0 0.0
    %337 = vmatpush1.msra.mxu0 0.0
    %338 = vmatprep.subr.mxu0 0.0
    %339 = vmatpush1.msra.mxu0 0.0
    %340 = vmatprep.subr.mxu0 0.0
    %341 = vmatpush1.msra.mxu0 0.0
    %342 = vmatprep.subr.mxu0 0.0
    %343 = vmatpush1.msra.mxu0 0.0
    %344 = vmatprep.subr.mxu0 0.0
    %345 = vmatpush1.msra.mxu0 0.0
    %346 = vmatprep.subr.mxu0 0.0
    %347 = vmatpush1.msra.mxu0 0.0
    %348 = vmatprep.subr.mxu0 0.0
    %349 = vmatpush1.msra.mxu0 0.0
    %350 = vmatprep.subr.mxu0 0.0
    %351 = vmatpush1.msra.mxu0 0.0
    %352 = vmatprep.subr.mxu0 0.0
    %353 = vmatpush1.msra.mxu0 0.0
    %354 = vmatprep.subr.mxu0 0.0
    %355 = vmatpush1.msra.mxu0 0.0
    %356 = vmatprep.subr.mxu0 0.0
    %357 = vmatpush1.msra.mxu0 0.0
    %358 = vmatprep.subr.mxu0 0.0
    %359 = vmatpush1.msra.mxu0 0.0
    %360 = vmatprep.mubr.f32.mxu0 0.0
    %361 = vmatmul.mubr.f32.gmra.mrb[0].mxu0 %v294
    %v362 = vpop.f32.mrb[0].mxu0
    %v363 = vadd.f32 0.0, %v362
    %v364 = vpop.f32.mrb[0].mxu0
    %v365 = vadd.f32 0.0, %v364
    %366 = vdwg.mxu0
    %367 = vmatprep.subr.mxu0 %v282
    %368 = vmatpush1.msra.mxu0 %v281
    %369 = vmatprep.subr.mxu0 0.0
    %370 = vmatpush1.msra.mxu0 0.0
    %371 = vmatprep.subr.mxu0 0.0
    %372 = vmatpush1.msra.mxu0 0.0
    %373 = vmatprep.subr.mxu0 0.0
    %374 = vmatpush1.msra.mxu0 0.0
    %375 = vmatprep.subr.mxu0 0.0
    %376 = vmatpush1.msra.mxu0 0.0
    %377 = vmatprep.subr.mxu0 0.0
    %378 = vmatpush1.msra.mxu0 0.0
    %379 = vmatprep.subr.mxu0 0.0
    %380 = vmatpush1.msra.mxu0 0.0
    %381 = vmatprep.subr.mxu0 0.0
    %382 = vmatpush1.msra.mxu0 0.0
    %383 = vmatprep.subr.mxu0 0.0
    %384 = vmatpush1.msra.mxu0 0.0
    %385 = vmatprep.subr.mxu0 0.0
    %386 = vmatpush1.msra.mxu0 0.0
    %387 = vmatprep.subr.mxu0 0.0
    %388 = vmatpush1.msra.mxu0 0.0
    %389 = vmatprep.subr.mxu0 0.0
    %390 = vmatpush1.msra.mxu0 0.0
    %391 = vmatprep.subr.mxu0 0.0
    %392 = vmatpush1.msra.mxu0 0.0
    %393 = vmatprep.subr.mxu0 0.0
    %394 = vmatpush1.msra.mxu0 0.0
    %395 = vmatprep.subr.mxu0 0.0
    %396 = vmatpush1.msra.mxu0 0.0
    %397 = vmatprep.subr.mxu0 0.0
    %398 = vmatpush1.msra.mxu0 0.0
    %399 = vmatprep.subr.mxu0 0.0
    %400 = vmatpush1.msra.mxu0 0.0
    %401 = vmatprep.subr.mxu0 0.0
    %402 = vmatpush1.msra.mxu0 0.0
    %403 = vmatprep.subr.mxu0 0.0
    %404 = vmatpush1.msra.mxu0 0.0
    %405 = vmatprep.subr.mxu0 0.0
    %406 = vmatpush1.msra.mxu0 0.0
    %407 = vmatprep.subr.mxu0 0.0
    %408 = vmatpush1.msra.mxu0 0.0
    %409 = vmatprep.subr.mxu0 0.0
    %410 = vmatpush1.msra.mxu0 0.0
    %411 = vmatprep.subr.mxu0 0.0
    %412 = vmatpush1.msra.mxu0 0.0
    %413 = vmatprep.subr.mxu0 0.0
    %414 = vmatpush1.msra.mxu0 0.0
    %415 = vmatprep.subr.mxu0 0.0
    %416 = vmatpush1.msra.mxu0 0.0
    %417 = vmatprep.subr.mxu0 0.0
    %418 = vmatpush1.msra.mxu0 0.0
    %419 = vmatprep.subr.mxu0 0.0
    %420 = vmatpush1.msra.mxu0 0.0
    %421 = vmatprep.subr.mxu0 0.0
    %422 = vmatpush1.msra.mxu0 0.0
    %423 = vmatprep.subr.mxu0 0.0
    %424 = vmatpush1.msra.mxu0 0.0
    %425 = vmatprep.subr.mxu0 0.0
    %426 = vmatpush1.msra.mxu0 0.0
    %427 = vmatprep.subr.mxu0 0.0
    %428 = vmatpush1.msra.mxu0 0.0
    %429 = vmatprep.subr.mxu0 0.0
    %430 = vmatpush1.msra.mxu0 0.0
    %431 = vmatprep.mubr.f32.mxu0 0.0
    %432 = vmatmul.mubr.f32.gmra.mrb[0].mxu0 %v294
    %v433 = vpop.f32.mrb[0].mxu0
    %v434 = vadd.f32 0.0, %v433
    %v435 = vpop.f32.mrb[0].mxu0
    %v436 = vadd.f32 0.0, %v435
    %437 = vdwg.mxu0
    %v442 = vrot.slane %v363, 1
    %v443 = vrot.slane %v365, 1
    %v444 = vrot.slane %v434, 1
    %v445 = vrot.slane %v436, 1
    %v454 = vsub.f32 %v271, %v363
    %v455 = vsub.f32 %v272, %v365
    %v456 = vsub.f32 %v273, %v434
    %v457 = vsub.f32 %v274, %v436
    %v458 = vsub.f32 %v275, %v442
    %v459 = vsub.f32 %v276, %v443
    %v460 = vsub.f32 %v277, %v444
    %v461 = vsub.f32 %v278, %v445
    %v462 = vmul.f32 %v454, %v454
    %v463 = vmul.f32 %v455, %v455
    %v464 = vmul.f32 %v456, %v456
    %v465 = vmul.f32 %v457, %v457
    %v466 = vmul.f32 %v458, %v458
    %v467 = vmul.f32 %v459, %v459
    %v468 = vmul.f32 %v460, %v460
    %v469 = vmul.f32 %v461, %v461
    %v478 = vrot.slane %v466, 7
    %vm479 = vcmask 1041409
    %v480 = vsel %vm479, %v478, %v462
    %v481 = vrot.slane %v467, 7
    %v482 = vsel %vm479, %v481, %v463
    %v483 = vrot.slane %v468, 7
    %v484 = vsel %vm479, %v483, %v464
    %v485 = vrot.slane %v469, 7
    %v486 = vsel %vm479, %v485, %v465
    %vm491 = vcmask 1041408
    %v492 = vsel %vm491, %v480, 0.0
    %v493 = vsel %vm491, %v482, 0.0
    %v494 = vadd.f32 %v492, %v493
    %v495 = vsel %vm491, %v484, 0.0
    %v496 = vadd.f32 %v494, %v495
    %v497 = vsel %vm491, %v486, 0.0
    %v498 = vadd.f32 %v496, %v497
    %499 = vadd.xlane.f32.xlu0 %v498
    %v500 = vpop.xlane.xlu0 %499
    %v501 = vrot.slane %v279, 4
    %v502 = vadd.f32 %v279, %v501
    %v503 = vrot.slane %v502, 2
    %v504 = vadd.f32 %v502, %v503
    %v505 = vrot.slane %v504, 1
    %v506 = vadd.f32 %v504, %v505
    %v507 = vrot.slane %v280, 4
    %v508 = vadd.f32 %v280, %v507
    %v509 = vrot.slane %v508, 2
    %v510 = vadd.f32 %v508, %v509
    %v511 = vrot.slane %v510, 1
    %v512 = vadd.f32 %v510, %v511
    %v513 = vrot.slane %v281, 4
    %v514 = vadd.f32 %v281, %v513
    %v515 = vrot.slane %v514, 2
    %v516 = vadd.f32 %v514, %v515
    %v517 = vrot.slane %v516, 1
    %v518 = vadd.f32 %v516, %v517
    %v519 = vrot.slane %v282, 4
    %v520 = vadd.f32 %v282, %v519
    %v521 = vrot.slane %v520, 2
    %v522 = vadd.f32 %v520, %v521
    %v523 = vrot.slane %v522, 1
    %v524 = vadd.f32 %v522, %v523
    %v525 = vrcp.pop 8.0
    %v526 = vmul.f32 %v506, %v525
    %v527 = vmul.f32 %v512, %v525
    %v528 = vmul.f32 %v518, %v525
    %v529 = vmul.f32 %v524, %v525
    %v530 = vsub.f32 %v279, %v526
    %v531 = vsub.f32 %v280, %v527
    %v532 = vsub.f32 %v281, %v528
    %v533 = vsub.f32 %v282, %v529
    %v534 = vmul.f32 %v530, %v530
    %v535 = vmul.f32 %v531, %v531
    %v536 = vmul.f32 %v532, %v532
    %v537 = vmul.f32 %v533, %v533
    %v538 = vadd.f32 %v534, %v535
    %v539 = vadd.f32 %v538, %v536
    %v540 = vadd.f32 %v539, %v537
    %541 = vadd.xlane.f32.xlu0 %v540
    %v542 = vpop.xlane.xlu0 %541
    %v543 = vrot.slane %v542, 4
    %v544 = vadd.f32 %v542, %v543
    %v545 = vrot.slane %v544, 2
    %v546 = vadd.f32 %v544, %v545
    %v547 = vrot.slane %v546, 1
    %v548 = vadd.f32 %v546, %v547
    %s549 = vtos %v548
    %s550 = smul.f32 %s549, 0.14285715
    %v551 = vstv %s550
    %v552 = vrcp.pop %v551
    %s553 = vtos %v552
    %v554 = vstv %s553
    %v555 = vmul.f32 %v500, %v554
    %v556 = vmax.f32 %v555, 1e-12
    %v557 = vmin.f32 %v556, 1e+12
    %vm558 = vcmask 1024
    %v559 = vsel %vm558, %v557, 0.0
    %560 = vadd.xlane.f32.xlu0 %v559
    %v561 = vpop.xlane.xlu0 %560
    %v562 = vrot.slane %v561, 4
    %v563 = vadd.f32 %v561, %v562
    %v564 = vrot.slane %v563, 2
    %v565 = vadd.f32 %v563, %v564
    %v566 = vrot.slane %v565, 1
    %v567 = vadd.f32 %v565, %v566
    %s568 = vtos %v567
    %s569 = scalar_lea.smem [#allocation7], 0
    %570 = sst [smem:[%s569]] %s568
    // Predicated region
    $region22: #{tpu_custom_call.1} parent=1 // pred_check
      _
    $region23: #{tpu_custom_call.1} parent=1 // pred_check_branch
      %572 = sbr.rel (0) target = $region25
    $region24: #{tpu_custom_call.1} parent=1 // pred_region
      %s574 = ssub.s32 16, 16
      %575 = vsyncadd [#allocation4], %s574
      %578 = dma.smem_to_hbm [#allocation7], 16, %s3, [#allocation4]
    $region25: #{tpu_custom_call.1} parent=1 // pred_fallthru
      _
    // Predicated region
    $region26: #{tpu_custom_call.1} parent=1 // pred_check
      _
    $region27: #{tpu_custom_call.1} parent=1 // pred_check_branch
      %580 = sbr.rel (0) target = $region29
    $region28: #{tpu_custom_call.1} parent=1 // pred_region
      %581 = dma.done [#allocation4], 16
    $region29: #{tpu_custom_call.1} parent=1 // pred_fallthru
      _
    %582 = sfence
    %583 = vsyncpa [#allocation3], 1
    %584 = vsyncpa [#allocation6], 1
    %585 = vsyncpa [#allocation4], 1

</llo_original>
